<compile_context>
chip_gen: v5e
topology: v5e:2x2
jax: 0.10.0
libtpu: 0.0.40
codegen_flags: <defaults>
</compile_context>

<pallas_src>
import functools

import numpy as np
import jax
import jax.numpy as jnp
from jax import lax
from jax.experimental import pallas as pl
from jax.experimental.pallas import tpu as pltpu

# ----------------------------- static config ---------------------------------
SHOT = 2                 # config.DATA.SHOT
GAMMA = 4.0              # config.MODEL.GAMMA
ETA = 2.0                # config.MODEL.ETA
ROI = 16                 # self.roi
STRIDES = [8, 16, 32]    # ROIAlign spatial scales 1/8, 1/16, 1/32
DIMS = [32, 64, 128]     # reduced stand-ins for resnet50 dims [512, 1024, 2048]
NLAYERS = [4, 6, 3]      # hooked bottleneck features per level (resnet50, feat_ids 4..16)
TOTAL_LAYERS = sum(NLAYERS)          # 13
STACK_IDS = [3, 9, 13]               # bincount(lids).__reversed__().cumsum()[:3]
EPS = 1e-5
VMEM_LIMIT = 32 * 1024 * 1024        # safe scoped-VMEM budget across v5e / v6e / v7x

# ============================ Pallas kernels ==================================


def _linear_kernel(x_ref, w_ref, b_ref, o_ref, *, relu):
    # x:(TM,Cin)bf16 @ w:(Cin,TN)bf16 -> f32 MXU accumulation; + bias (f32) [+ ReLU];
    # final cast to the output dtype (bf16 for feature tensors).
    acc = jnp.dot(x_ref[...], w_ref[...], preferred_element_type=jnp.float32)
    acc = acc + b_ref[...]
    if relu:
        acc = jnp.maximum(acc, 0.0)
    o_ref[...] = acc.astype(o_ref.dtype)


def linear_pallas(x, w, b, *, relu=False, out_dtype=jnp.bfloat16, tm=512, tn=2048):
    """Row x cout tiled fused (matmul + bias [+ ReLU]).  x:(N,Cin), w:(Cin,Cout), b:(Cout,).

    Operands are cast to bf16 at the call boundary (halves DMA bytes and VMEM block
    footprint); bias + ReLU stay in f32 in-kernel before the cast to `out_dtype`.
    """
    n, cin = x.shape
    cout = w.shape[1]
    x = x.astype(jnp.bfloat16)
    w = w.astype(jnp.bfloat16)
    if cin < 8:
        # Tiny contraction (cin=3 backbone stub): zero-pad K to 8 and run one padded
        # MXU pass instead of VPU lane-slice broadcast FMAs.
        x = jnp.pad(x, ((0, 0), (0, 8 - cin)))
        w = jnp.pad(w, ((0, 8 - cin), (0, 0)))
        cin = 8
    # TODO(synk): re-derive (tm, tn) for v7x (64 MiB VMEM) when DIMS become the real
    # ResNet-50 widths (512/1024/2048); bf16 blocks at tm=256-512, tn<=2048 keep
    # double-buffered blocks inside the scoped budget.
    tm = n if n <= tm else max(8, (tm // 8) * 8)
    tn = cout if cout <= tn else max(128, (tn // 128) * 128)
    grid = (pl.cdiv(n, tm), pl.cdiv(cout, tn))
    kernel = functools.partial(_linear_kernel, relu=relu)
    return pl.pallas_call(
        kernel,
        out_shape=jax.ShapeDtypeStruct((n, cout), out_dtype),
        grid=grid,
        in_specs=[pl.BlockSpec((tm, cin), lambda i, j: (i, 0)),
                  pl.BlockSpec((cin, tn), lambda i, j: (0, j)),
                  pl.BlockSpec((1, tn), lambda i, j: (0, j))],
        out_specs=pl.BlockSpec((tm, tn), lambda i, j: (i, j)),
        compiler_params=pltpu.CompilerParams(
            dimension_semantics=("parallel", "parallel"),
            vmem_limit_bytes=VMEM_LIMIT),
    )(x, w, b.reshape(1, cout).astype(jnp.float32))


def _corr_mean_kernel(q_ref, s_ref, o_ref, *, ns, shot):
    # q:(GB,Nq,C)bf16, s:(GB,SHOT*Ns,C)bf16 -> per-shot support-spatial mean of
    # relu(cosine(q,s)), written as dense (SHOT, GB, Nq) planes.
    q = q_ref[...]
    s = s_ref[...]
    # Norms in f32 (rsqrt rides the EUP slot); the big matmul stays bf16 on the MXU.
    qf = q.astype(jnp.float32)
    sf = s.astype(jnp.float32)
    q_inv = lax.rsqrt(jnp.sum(qf * qf, axis=-1, keepdims=True) + EPS)      # (GB,Nq,1)
    s_inv = lax.rsqrt(jnp.sum(sf * sf, axis=-1) + EPS)[:, None, :]         # (GB,1,K)
    # Contract the shared channel (last) dim directly -> no host-side (C,Ns) transpose.
    corr = jnp.einsum('gqc,gkc->gqk', q, s, preferred_element_type=jnp.float32)
    corr = jnp.maximum(corr * q_inv * s_inv, 0.0)                          # .clamp(min=0)
    for t in range(shot):
        o_ref[t, :, :] = jnp.mean(corr[:, :, t * ns:(t + 1) * ns], axis=-1)


def cosine_corr_mean(q, s, *, ns, shot, block_g=None):
    """q:(G,Nq,C), s:(G,SHOT*Ns,C) -> per-shot mean of relu(cosine corr): (SHOT,G,Nq).

    The full (G,Nq,SHOT*Ns) correlation never leaves VMEM; both shots share a single
    DMA + normalization of the large q operand.
    TODO(synk): at real ResNet-50 widths add an Nq grid axis (tiles of 512-1024) so
    blocks stay inside the v7x scoped-VMEM budget and the 2 TCs have work to shard.
    """
    g, nq, c = q.shape
    k = s.shape[1]
    if block_g is None:
        block_g = g                                   # whole group per step at toy sizes
    kernel = functools.partial(_corr_mean_kernel, ns=ns, shot=shot)
    return pl.pallas_call(
        kernel,
        out_shape=jax.ShapeDtypeStruct((shot, g, nq), jnp.float32),
        grid=(pl.cdiv(g, block_g),),
        in_specs=[pl.BlockSpec((block_g, nq, c), lambda i: (i, 0, 0)),
                  pl.BlockSpec((block_g, k, c), lambda i: (i, 0, 0))],
        out_specs=pl.BlockSpec((shot, block_g, nq), lambda i: (0, i, 0)),
        compiler_params=pltpu.CompilerParams(
            dimension_semantics=("parallel",),
            vmem_limit_bytes=VMEM_LIMIT),
    )(q.astype(jnp.bfloat16), s.astype(jnp.bfloat16))


# ============================ plain-JAX glue ==================================


def avg_pool_nhwc(x, stride):
    b, h, w, c = x.shape
    h2, w2 = (h // stride) * stride, (w // stride) * stride
    x = x[:, :h2, :w2, :]
    return x.reshape(b, h2 // stride, stride, w2 // stride, stride, c).mean(axis=(2, 4))


def extract_feats_synthetic(image_nhwc, params):
    # TODO(synk): pretrained ResNet-50 backbone (extract_feat_res) is unavailable; replaced
    # by deterministic 1x1 projections of average-pooled pyramids.  All NLAYERS[lvl]
    # projections of a level are fused into ONE tiled Pallas matmul (weights concatenated
    # along cout), bias+ReLU fused in-kernel; features stay NHWC and are stored bf16.
    b = image_nhwc.shape[0]
    feats = []
    for lvl in range(3):
        stride, c_out, nl = STRIDES[lvl], DIMS[lvl], NLAYERS[lvl]
        pooled = avg_pool_nhwc(image_nhwc, stride)              # (b, h, w, 3)
        _, h, w, _ = pooled.shape
        x = pooled.reshape(-1, 3)
        w_cat = jnp.concatenate([p[0] for p in params['backbone'][lvl]], axis=1)  # (3, nl*c)
        b_cat = jnp.concatenate([p[1] for p in params['backbone'][lvl]], axis=0)  # (nl*c,)
        y = linear_pallas(x, w_cat, b_cat, relu=True)           # (b*h*w, nl*c) bf16
        y = y.reshape(b, h, w, nl, c_out)
        for j in range(nl):
            feats.append(y[:, :, :, j, :])                      # NHWC (b, h, w, c)
    return feats


def roi_align_nhwc(feat, boxes, out_size, spatial_scale):
    # TODO(synk): exact torchvision ROIAlign bin-averaging approximated by a single
    # bilinear sample per output bin; kept as a plain-JAX gather (a scalar-prefetch
    # Pallas DMA-gather is the remaining non-kernel hotspot at real feature widths).
    _, h, w, _ = feat.shape
    bidx = boxes[:, 0].astype(jnp.int32)
    x1 = boxes[:, 1] * spatial_scale
    y1 = boxes[:, 2] * spatial_scale
    x2 = boxes[:, 3] * spatial_scale
    y2 = boxes[:, 4] * spatial_scale
    bin_w = (x2 - x1) / out_size
    bin_h = (y2 - y1) / out_size
    grid = jnp.arange(out_size, dtype=jnp.float32) + 0.5
    ys = y1[:, None] + grid[None, :] * bin_h[:, None]
    xs = x1[:, None] + grid[None, :] * bin_w[:, None]

    def sample_one(bi, yy, xx):
        f = feat[bi]                                            # (H, W, C)
        yg, xg = jnp.meshgrid(yy, xx, indexing='ij')            # (out, out)
        y0 = jnp.floor(yg)
        x0 = jnp.floor(xg)
        wy1 = (yg - y0)[..., None]
        wx1 = (xg - x0)[..., None]
        wy0 = 1.0 - wy1
        wx0 = 1.0 - wx1
        y0c = jnp.clip(y0, 0, h - 1).astype(jnp.int32)
        y1c = jnp.clip(y0 + 1, 0, h - 1).astype(jnp.int32)
        x0c = jnp.clip(x0, 0, w - 1).astype(jnp.int32)
        x1c = jnp.clip(x0 + 1, 0, w - 1).astype(jnp.int32)
        v00 = f[y0c, x0c]
        v01 = f[y0c, x1c]
        v10 = f[y1c, x0c]
        v11 = f[y1c, x1c]
        return v00 * wy0 * wx0 + v01 * wy0 * wx1 + v10 * wy1 * wx0 + v11 * wy1 * wx1

    return jax.vmap(sample_one)(bidx, ys, xs)                   # (R, out, out, C)


def multilayer_similarity_allshots(query_feats, support_feats):
    """Mirrors Similarity.multilayer_similarity grouped by stack_ids; all SHOT shots share
    one Pallas call per group and only the support-spatial mean is produced (fused
    in-kernel — the HPN learner simplification only consumes that mean)."""
    n = len(query_feats)
    bounds = [n - STACK_IDS[2], n - STACK_IDS[1], n - STACK_IDS[0], n]   # [0, 4, 10, 13]
    ns = ROI * ROI
    groups = []
    for g in range(3):
        lay = list(range(bounds[g], bounds[g + 1]))
        nl = len(lay)
        b, ha, wa, c = query_feats[lay[0]].shape
        q = jnp.stack([query_feats[l].reshape(b, ha * wa, c) for l in lay], 0)
        q = q.reshape(nl * b, ha * wa, c)                        # (G, Nq, C) bf16
        s = jnp.stack([support_feats[l].reshape(b, SHOT * ns, c) for l in lay], 0)
        s = s.reshape(nl * b, SHOT * ns, c)                      # (G, SHOT*Ns, C) bf16
        cm = cosine_corr_mean(q, s, ns=ns, shot=SHOT)            # (SHOT, G, Nq) f32
        cm = cm.reshape(SHOT, nl, b, ha, wa).transpose(0, 2, 1, 3, 4)   # (SHOT, b, nl, h, w)
        groups.append(cm)
    return [groups[2], groups[1], groups[0]]                     # [l4, l3, l2] like HSNet


def learner_simplified(cmeans, lparams):
    # TODO(synk): HPN Learner (center-pivot 4D convs) unavailable; simplified to the
    # (in-kernel) support-spatial mean + bilinear upsample + learned 13->1 mixing
    # (tiny reduction kept in plain JAX to avoid a last-dim-1 store).
    h0 = max(m.shape[2] for m in cmeans)
    w0 = max(m.shape[3] for m in cmeans)
    ups = [jax.image.resize(m, (m.shape[0], m.shape[1], h0, w0), method='bilinear')
           for m in cmeans]
    x = jnp.concatenate(ups, axis=1)                            # (b, 13, h0, w0)
    w_h, b_h = lparams                                          # (13, 1), (1,)
    y = jnp.einsum('blhw,l->bhw', x, w_h[:, 0]) + b_h[0]
    return y[:, None]                                           # (b, 1, h0, w0)


# =========================== host-side box check ==============================


def compute_expand_scale(boxes, mode):
    """Host-side (numpy) replica of the data-dependent expansion check — keeps the
    device forward free of host syncs / non-jittable bool() branches."""
    bx = np.asarray(boxes)
    b_size = np.stack([bx[:, 4] - bx[:, 2], bx[:, 3] - bx[:, 1]], axis=-1)
    bs_mean = b_size.reshape(-1, SHOT, 2).astype(np.float32).mean(axis=1)
    if not np.any(bs_mean < GAMMA):
        return None
    min_scale = float(bs_mean.min())
    expand_scale = (GAMMA - min_scale) / ETA + 1.0
    expand_scale = min(expand_scale, 3.0)
    if mode == 'train':
        expand_scale = min(expand_scale, 2.0)
    return expand_scale


# =============================== SSD forward ==================================


def ssd_forward(params, image, boxes, mode='test', expand_scale=None):
    # TODO(synk): the mode == 'car_test' branch (precomputed support feats) is not implemented.
    b, _, imh, imw = image.shape
    flag = expand_scale is not None
    if flag:
        new_h, new_w = int(imh * expand_scale), int(imw * expand_scale)
        image = jax.image.resize(image, (b, image.shape[1], new_h, new_w), method='bilinear')
        boxes = boxes.at[:, 1:5].multiply(expand_scale)

    image_nhwc = jnp.transpose(image, (0, 2, 3, 1))             # single NCHW->NHWC switch
    query_feats = extract_feats_synthetic(image_nhwc, params)   # 13 x NHWC (bf16)

    new_query_feats = []
    support_feats = []                  # per layer: (b, SHOT, ROI, ROI, c) post-FEM, bf16
    layer_idx = 0
    for lvl in range(3):                                        # roi_l == level boundaries
        nl, c = NLAYERS[lvl], DIMS[lvl]
        level_q = query_feats[layer_idx:layer_idx + nl]
        layer_idx += nl
        # ROIAlign on pre-FEM query features (matches original ordering).
        level_s = [roi_align_nhwc(qf, boxes, ROI, 1.0 / STRIDES[lvl]).astype(jnp.bfloat16)
                   for qf in level_q]                            # each (b*SHOT, ROI, ROI, c)

        # TODO(synk): FEM definition not provided; approximated as a shared learned 1x1
        # conv — query + support rows of all nl layers fused into ONE Pallas matmul per
        # level, so the (C,C) FEM weight streams from HBM once.
        w_fem, b_fem = params['fem'][lvl]
        bb, h, w, _ = level_q[0].shape
        nq_rows = nl * bb * h * w
        xq = jnp.stack(level_q, 0).reshape(-1, c)
        xs = jnp.stack(level_s, 0).reshape(-1, c)
        y_all = linear_pallas(jnp.concatenate([xq, xs], axis=0), w_fem, b_fem, relu=False)
        yq = y_all[:nq_rows].reshape(nl, bb, h, w, c)
        ys = y_all[nq_rows:].reshape(nl, bb, SHOT, ROI, ROI, c)
        for j in range(nl):
            new_query_feats.append(yq[j])                       # (b, h, w, c)
            support_feats.append(ys[j])                         # (b, SHOT, 16, 16, c)
    query_feats = new_query_feats

    groups = multilayer_similarity_allshots(query_feats, support_feats)  # 3 x (SHOT,b,nl,h,w)
    preds = []
    for i in range(SHOT):
        cmeans = [grp[i] for grp in groups]
        preds.append(learner_simplified(cmeans, params['learner']))
    pred_den = jnp.concatenate(preds, axis=1).mean(axis=1, keepdims=True)

    if flag:
        original_sum = pred_den.sum(axis=(1, 2, 3), keepdims=True)
        pred_den = jax.image.resize(pred_den, (b, 1, imh, imw), method='bilinear')
        pred_den = pred_den / pred_den.sum(axis=(1, 2, 3), keepdims=True) * original_sum
    return pred_den


# =========================== deterministic params =============================


def init_params(key):
    params = {'backbone': [], 'fem': [], 'learner': None}
    for lvl in range(3):
        layer_params = []
        for _ in range(NLAYERS[lvl]):
            key, k1, k2 = jax.random.split(key, 3)
            w = jax.random.normal(k1, (3, DIMS[lvl]), jnp.float32) * 0.5
            bb = jax.random.normal(k2, (DIMS[lvl],), jnp.float32) * 0.1
            layer_params.append((w, bb))
        params['backbone'].append(layer_params)
        key, k1 = jax.random.split(key)
        wf = jax.random.normal(k1, (DIMS[lvl], DIMS[lvl]), jnp.float32) / jnp.sqrt(
            jnp.float32(DIMS[lvl]))
        bf = jnp.zeros((DIMS[lvl],), jnp.float32)
        params['fem'].append((wf, bf))
    key, k1 = jax.random.split(key)
    wh = jax.random.normal(k1, (TOTAL_LAYERS, 1), jnp.float32) * 0.1
    bh = jnp.zeros((1,), jnp.float32)
    params['learner'] = (wh, bh)
    return params


if __name__ == "__main__":
    key = jax.random.PRNGKey(0)
    k_params, k_img = jax.random.split(key)
    params = init_params(k_params)

    image = jax.random.normal(k_img, (2, 3, 64, 64), jnp.float32)   # NCHW
    # boxes: (b*shot, 5) = [batch_idx, x1, y1, x2, y2] in image coords
    boxes = jnp.array([[0., 8., 8., 40., 40.],
                       [0., 16., 12., 48., 44.],
                       [1., 4., 4., 36., 30.],
                       [1., 20., 20., 56., 50.]], jnp.float32)

    mode = 'test'
    expand_scale = compute_expand_scale(boxes, mode)    # host-side data-dependent branch
    pred_den = ssd_forward(params, image, boxes, mode=mode, expand_scale=expand_scale)
    jax.block_until_ready(pred_den)
    assert pred_den.shape == (2, 1, 8, 8) and pred_den.dtype == jnp.float32
    print("KERNEL_OK")
</pallas_src>

<mosaic_0001>
module attributes {stable_mosaic.version = 11 : i64} {
  func.func @_linear_kernel(%arg0: i32, %arg1: i32, %arg2: memref<128x8xbf16, #tpu.memory_space<vmem>>, %arg3: memref<8x128xbf16, #tpu.memory_space<vmem>>, %arg4: memref<1x128xf32, #tpu.memory_space<vmem>>, %arg5: memref<128x128xbf16, #tpu.memory_space<vmem>>) attributes {dimension_semantics = [#tpu.dimension_semantics<parallel>, #tpu.dimension_semantics<parallel>], iteration_bounds = array<i64: 1, 1>, scalar_prefetch = 0 : i64, scratch_operands = 0 : i64, tpu.core_type = #tpu.core_type<tc>, window_params = [{transform_indices = @transform_0, window_bounds = array<i64: 128, 8>}, {transform_indices = @transform_1, window_bounds = array<i64: 8, 128>}, {transform_indices = @transform_2, window_bounds = array<i64: 1, 128>}, {transform_indices = @transform_3, window_bounds = array<i64: 128, 128>}]} {
    %c0 = arith.constant 0 : index
    %c0_0 = arith.constant 0 : index
    %0 = vector.load %arg2[%c0, %c0_0] : memref<128x8xbf16, #tpu.memory_space<vmem>>, vector<128x8xbf16>
    %c0_1 = arith.constant 0 : index
    %c0_2 = arith.constant 0 : index
    %1 = vector.load %arg3[%c0_1, %c0_2] : memref<8x128xbf16, #tpu.memory_space<vmem>>, vector<8x128xbf16>
    %cst = arith.constant dense<0.000000e+00> : vector<128x128xf32>
    %2 = tpu.matmul %0, %1, %cst {dimension_numbers = #tpu.dot_dimension_numbers<[1], [0], [0], [1], [0, 0, 1, 1], [], []>} : vector<128x8xbf16>, vector<8x128xbf16>, vector<128x128xf32> -> vector<128x128xf32>
    %c0_3 = arith.constant 0 : index
    %c0_4 = arith.constant 0 : index
    %3 = vector.load %arg4[%c0_3, %c0_4] : memref<1x128xf32, #tpu.memory_space<vmem>>, vector<1x128xf32>
    %4 = vector.broadcast %3 : vector<1x128xf32> to vector<128x128xf32>
    %5 = arith.addf %2, %4 : vector<128x128xf32>
    %cst_5 = arith.constant 0.000000e+00 : f32
    %6 = vector.broadcast %cst_5 : f32 to vector<128x128xf32>
    %7 = arith.maximumf %5, %6 : vector<128x128xf32>
    %8 = arith.truncf %7 : vector<128x128xf32> to vector<128x128xbf16>
    %c0_6 = arith.constant 0 : index
    %c0_7 = arith.constant 0 : index
    %9 = vector.load %arg5[%c0_6, %c0_7] : memref<128x128xbf16, #tpu.memory_space<vmem>>, vector<128x128xbf16>
    tpu.vector_store %arg5[%c0_6, %c0_7], %8 {strides = array<i32>} : memref<128x128xbf16, #tpu.memory_space<vmem>>, vector<128x128xbf16>,
    return
  }
  func.func @transform_0(%arg0: i32, %arg1: i32) -> (i32, i32) {
    %c0_i32 = arith.constant 0 : i32
    %c0_i32_0 = arith.constant 0 : i32
    return %arg0, %c0_i32 : i32, i32
  }
  func.func @transform_1(%arg0: i32, %arg1: i32) -> (i32, i32) {
    %c0_i32 = arith.constant 0 : i32
    %c0_i32_0 = arith.constant 0 : i32
    return %c0_i32, %arg1 : i32, i32
  }
  func.func @transform_2(%arg0: i32, %arg1: i32) -> (i32, i32) {
    %c0_i32 = arith.constant 0 : i32
    %c0_i32_0 = arith.constant 0 : i32
    return %c0_i32, %arg1 : i32, i32
  }
  func.func @transform_3(%arg0: i32, %arg1: i32) -> (i32, i32) {
    %c0_i32 = arith.constant 0 : i32
    return %arg0, %arg1 : i32, i32
  }
}

</mosaic_0001>

<llo_original>
// kernel: tpu_custom_call.1
$region0: #{tpu_custom_call.1}
  #allocation0 [shape = 'u32[]', space=smem, size = 0x4, offset = 0x4, fixed_abs, tag = 'smem constant byte address 0x4 - core index']
  #allocation1 [shape = 'u32[72,128]{1,0:T(1,128)}', space=vmem, size = 0x9000, scoped, tag = 'internal scratch']
  %s0 = inlined_call_operand.vmem [shape: bf16[128,8], index: 0, kind: input, shape index: {}]
  %s1 = inlined_call_operand.vmem [shape: bf16[8,128], index: 1, kind: input, shape index: {}]
  %s2 = inlined_call_operand.vmem [shape: f32[1,128], index: 2, kind: input, shape index: {}]
  %s3 = inlined_call_operand.hbm [shape: bf16[128,128], index: 3, kind: output, shape index: {}]
  %s4 = sld [smem:[#allocation0]]
  $region22: #{tpu_custom_call.1} parent=0
    _
  %s6 = ssub.s32 1, %s4
  %s7 = scalar_select 0, %s6, %s4
  $region1: #{tpu_custom_call.1} parent=0
    #allocation2 [shape = 'u8[32768]{0}', space=vmem, size = 0x8000, scoped, tag = 'output window, operand 0, single buffered']
    #allocation3 [shape = 's32[1]{0}', space=sflag, size = 0x4, scoped, tag = 'scoped memory for tpu_custom_call.1']
    %8 = vsyncpa [#allocation3], 0
    // Predicated region
    $region2: #{tpu_custom_call.1} parent=1 // pred_check
      _
    $region3: #{tpu_custom_call.1} parent=1 // pred_check_branch
      %10 = sbr.rel (0) target = $region5
    $region4: #{tpu_custom_call.1} parent=1 // pred_region
      _
    $region5: #{tpu_custom_call.1} parent=1 // pred_fallthru
      _
    // Predicated region
    $region6: #{tpu_custom_call.1} parent=1 // pred_check
      _
    $region7: #{tpu_custom_call.1} parent=1 // pred_check_branch
      %12 = sbr.rel (0) target = $region9
    $region8: #{tpu_custom_call.1} parent=1 // pred_region
      _
    $region9: #{tpu_custom_call.1} parent=1 // pred_fallthru
      _
    // Predicated region
    $region10: #{tpu_custom_call.1} parent=1 // pred_check
      _
    $region11: #{tpu_custom_call.1} parent=1 // pred_check_branch
      %14 = sbr.rel (0) target = $region13
    $region12: #{tpu_custom_call.1} parent=1 // pred_region
      _
    $region13: #{tpu_custom_call.1} parent=1 // pred_fallthru
      _
    %v16 = vld [vmem:[%s0] sm:$0xf]
    %v17 = vld [vmem:[%s0 + $0x4] sm:$0xf]
    %v18 = vld [vmem:[%s0 + $0x8] sm:$0xf]
    %v19 = vld [vmem:[%s0 + $0xc] sm:$0xf]
    %v20 = vld [vmem:[%s0 + $0x10] sm:$0xf]
    %v21 = vld [vmem:[%s0 + $0x14] sm:$0xf]
    %v22 = vld [vmem:[%s0 + $0x18] sm:$0xf]
    %v23 = vld [vmem:[%s0 + $0x1c] sm:$0xf]
    %v24 = vld [vmem:[%s0 + $0x20] sm:$0xf]
    %v25 = vld [vmem:[%s0 + $0x24] sm:$0xf]
    %v26 = vld [vmem:[%s0 + $0x28] sm:$0xf]
    %v27 = vld [vmem:[%s0 + $0x2c] sm:$0xf]
    %v28 = vld [vmem:[%s0 + $0x30] sm:$0xf]
    %v29 = vld [vmem:[%s0 + $0x34] sm:$0xf]
    %v30 = vld [vmem:[%s0 + $0x38] sm:$0xf]
    %v31 = vld [vmem:[%s0 + $0x3c] sm:$0xf]
    %v32 = vld [vmem:[%s1] sm:$0xf]
    %v33 = vld [vmem:[%s2] sm:$0x1]
    %v35 = vperm.slane %v33, 0
    %v53 = vunpack.c.l.b16 %v16
    %v54 = vunpack.c.l.b16 %v17
    %v55 = vunpack.c.l.b16 %v18
    %v56 = vunpack.c.l.b16 %v19
    %v57 = vunpack.c.l.b16 %v20
    %v58 = vunpack.c.l.b16 %v21
    %v59 = vunpack.c.l.b16 %v22
    %v60 = vunpack.c.l.b16 %v23
    %v61 = vunpack.c.l.b16 %v24
    %v62 = vunpack.c.l.b16 %v25
    %v63 = vunpack.c.l.b16 %v26
    %v64 = vunpack.c.l.b16 %v27
    %v65 = vunpack.c.l.b16 %v28
    %v66 = vunpack.c.l.b16 %v29
    %v67 = vunpack.c.l.b16 %v30
    %v68 = vunpack.c.l.b16 %v31
    %v69 = vpack.c.b16 %v54, %v53
    %v70 = vpack.c.b16 %v56, %v55
    %v71 = vpack.c.b16 %v58, %v57
    %v72 = vpack.c.b16 %v60, %v59
    %v73 = vpack.c.b16 %v62, %v61
    %v74 = vpack.c.b16 %v64, %v63
    %v75 = vpack.c.b16 %v66, %v65
    %v76 = vpack.c.b16 %v68, %v67
    %vm77 = vcmask 64512
    %v79 = vsel %vm77, %v69, 0
    %v82 = vsel %vm77, %v70, 0
    %v85 = vsel %vm77, %v71, 0
    %v88 = vsel %vm77, %v72, 0
    %v91 = vsel %vm77, %v73, 0
    %v94 = vsel %vm77, %v74, 0
    %v97 = vsel %vm77, %v75, 0
    %v100 = vsel %vm77, %v76, 0
    %vm102 = vcmask 1043456
    %v104 = vsel %vm102, %v32, 0
    %106 = vmatpush.bf16.msra.mxu0 0
    %107 = vmatpush.bf16.msra.mxu0 0
    %108 = vmatpush.bf16.msra.mxu0 0
    %109 = vmatpush.bf16.msra.mxu0 0
    %110 = vmatpush.bf16.msra.mxu0 0
    %111 = vmatpush.bf16.msra.mxu0 0
    %112 = vmatpush.bf16.msra.mxu0 0
    %113 = vmatpush.bf16.msra.mxu0 %v104
    %114 = vmatmul.bf16.gmra.mxu0 %v79
    %v115 = vpop.f32.mrf.mxu0
    %v116 = vadd.f32 %v35, %v115
    %v117 = vpop.f32.mrf.mxu0
    %v118 = vadd.f32 %v35, %v117
    %119 = vmatmul.bf16.gmra.mxu0 %v82
    %v120 = vpop.f32.mrf.mxu0
    %v121 = vadd.f32 %v35, %v120
    %v122 = vpop.f32.mrf.mxu0
    %v123 = vadd.f32 %v35, %v122
    %124 = vmatmul.bf16.gmra.mxu0 %v85
    %v125 = vpop.f32.mrf.mxu0
    %v126 = vadd.f32 %v35, %v125
    %v127 = vpop.f32.mrf.mxu0
    %v128 = vadd.f32 %v35, %v127
    %129 = vmatmul.bf16.gmra.mxu0 %v88
    %v130 = vpop.f32.mrf.mxu0
    %v131 = vadd.f32 %v35, %v130
    %v132 = vpop.f32.mrf.mxu0
    %v133 = vadd.f32 %v35, %v132
    %134 = vmatmul.bf16.gmra.mxu0 %v91
    %v135 = vpop.f32.mrf.mxu0
    %v136 = vadd.f32 %v35, %v135
    %v137 = vpop.f32.mrf.mxu0
    %v138 = vadd.f32 %v35, %v137
    %139 = vmatmul.bf16.gmra.mxu0 %v94
    %v140 = vpop.f32.mrf.mxu0
    %v141 = vadd.f32 %v35, %v140
    %v142 = vpop.f32.mrf.mxu0
    %v143 = vadd.f32 %v35, %v142
    %144 = vmatmul.bf16.gmra.mxu0 %v97
    %v145 = vpop.f32.mrf.mxu0
    %v146 = vadd.f32 %v35, %v145
    %v147 = vpop.f32.mrf.mxu0
    %v148 = vadd.f32 %v35, %v147
    %149 = vmatmul.bf16.gmra.mxu0 %v100
    %v150 = vpop.f32.mrf.mxu0
    %v151 = vadd.f32 %v35, %v150
    %v152 = vpop.f32.mrf.mxu0
    %v153 = vadd.f32 %v35, %v152
    %154 = vdwg.mxu0
    %v155 = vmax.f32 %v116, 0.0
    %v156 = vmax.f32 %v118, 0.0
    %v157 = vmax.f32 %v121, 0.0
    %v158 = vmax.f32 %v123, 0.0
    %v159 = vmax.f32 %v126, 0.0
    %v160 = vmax.f32 %v128, 0.0
    %v161 = vmax.f32 %v131, 0.0
    %v162 = vmax.f32 %v133, 0.0
    %v163 = vmax.f32 %v136, 0.0
    %v164 = vmax.f32 %v138, 0.0
    %v165 = vmax.f32 %v141, 0.0
    %v166 = vmax.f32 %v143, 0.0
    %v167 = vmax.f32 %v146, 0.0
    %v168 = vmax.f32 %v148, 0.0
    %v169 = vmax.f32 %v151, 0.0
    %v170 = vmax.f32 %v153, 0.0
    %v171 = vpack.c.bf16 %v155, %v155
    %v172 = vpack.c.bf16 %v156, %v156
    %v173 = vpack.c.bf16 %v157, %v157
    %v174 = vpack.c.bf16 %v158, %v158
    %v175 = vpack.c.bf16 %v159, %v159
    %v176 = vpack.c.bf16 %v160, %v160
    %v177 = vpack.c.bf16 %v161, %v161
    %v178 = vpack.c.bf16 %v162, %v162
    %v179 = vpack.c.bf16 %v163, %v163
    %v180 = vpack.c.bf16 %v164, %v164
    %v181 = vpack.c.bf16 %v165, %v165
    %v182 = vpack.c.bf16 %v166, %v166
    %v183 = vpack.c.bf16 %v167, %v167
    %v184 = vpack.c.bf16 %v168, %v168
    %v185 = vpack.c.bf16 %v169, %v169
    %v186 = vpack.c.bf16 %v170, %v170
    %187 = vst [vmem:[#allocation2] sm:$0xf] %v171
    %188 = vst [vmem:[#allocation2 + $0x4] sm:$0xf] %v172
    %189 = vst [vmem:[#allocation2 + $0x8] sm:$0xf] %v173
    %190 = vst [vmem:[#allocation2 + $0xc] sm:$0xf] %v174
    %191 = vst [vmem:[#allocation2 + $0x10] sm:$0xf] %v175
    %192 = vst [vmem:[#allocation2 + $0x14] sm:$0xf] %v176
    %193 = vst [vmem:[#allocation2 + $0x18] sm:$0xf] %v177
    %194 = vst [vmem:[#allocation2 + $0x1c] sm:$0xf] %v178
    %195 = vst [vmem:[#allocation2 + $0x20] sm:$0xf] %v179
    %196 = vst [vmem:[#allocation2 + $0x24] sm:$0xf] %v180
    %197 = vst [vmem:[#allocation2 + $0x28] sm:$0xf] %v181
    %198 = vst [vmem:[#allocation2 + $0x2c] sm:$0xf] %v182
    %199 = vst [vmem:[#allocation2 + $0x30] sm:$0xf] %v183
    %200 = vst [vmem:[#allocation2 + $0x34] sm:$0xf] %v184
    %201 = vst [vmem:[#allocation2 + $0x38] sm:$0xf] %v185
    %202 = vst [vmem:[#allocation2 + $0x3c] sm:$0xf] %v186
    // Predicated region
    $region14: #{tpu_custom_call.1} parent=1 // pred_check
      _
    $region15: #{tpu_custom_call.1} parent=1 // pred_check_branch
      %204 = sbr.rel (0) target = $region17
    $region16: #{tpu_custom_call.1} parent=1 // pred_region
      %206 = vsyncadd [#allocation3], 0
      %s207 = sshll.u32 [#allocation2], 4
      %s208 = int_to_ptr.vmem [resolvable:$true] %s207
      %s209 = sshll.u32 %s3, 4
      %s210 = int_to_ptr.hbm [resolvable:$true] %s209
      %215 = dma.vmem_to_hbm [thread:$0]  %s208, 1024, %s210, [#allocation3], 64, 64, 4
    $region17: #{tpu_custom_call.1} parent=1 // pred_fallthru
      _
    // Predicated region
    $region18: #{tpu_custom_call.1} parent=1 // pred_check
      _
    $region19: #{tpu_custom_call.1} parent=1 // pred_check_branch
      %217 = sbr.rel (0) target = $region21
    $region20: #{tpu_custom_call.1} parent=1 // pred_region
      %219 = dma.done [#allocation3], 1024
    $region21: #{tpu_custom_call.1} parent=1 // pred_fallthru
      _
    %220 = vsyncpa [#allocation3], 1

</llo_original>
